<compile_context>
chip_gen: v7x
topology: tpu7x:2x2x1
jax: 0.10.0
libtpu: 0.0.40
codegen_flags: <defaults>
</compile_context>

<pallas_src>
import jax
import jax.numpy as jnp
from jax.experimental import pallas as pl
from jax.experimental.pallas import tpu as pltpu


def _round_up(v, m):
    return ((v + m - 1) // m) * m


def _cdiv(a, b):
    return (a + b - 1) // b


# ----------------------------------------------------------------------------
# Pallas kernel.
# Grid = (Bp/tm, Np/tn, Mp/tk); reduction axis (k over M = in_features) last,
# marked "arbitrary". The output (tm, tn) block is resident across k and used
# directly as the f32 accumulator; per-output-row dequant scale and bias are
# applied once, in place, at the final k step.
# ----------------------------------------------------------------------------
def qsl_kernel(x_ref, wqt_ref, s_ref, b_ref, o_ref):
    k = pl.program_id(2)

    @pl.when(k == 0)
    def _init():
        o_ref[...] = jnp.zeros_like(o_ref)

    # o += x @ WqT  -- (tm, tk) bf16  x  (tk, tn) int8->bf16 (exact), f32 acc.
    o_ref[...] += jnp.dot(
        x_ref[...],
        wqt_ref[...].astype(jnp.bfloat16),
        preferred_element_type=jnp.float32,
    )

    @pl.when(k == pl.num_programs(2) - 1)
    def _finalize():
        # Per-output-row dequant scale + bias, fused once on the accumulator.
        o_ref[...] = o_ref[...] * s_ref[...] + b_ref[...]


def quantized_sparse_linear(x, wq, scales, bias=None, *, tm=None, tn=None, tk=None):
    """y = x @ (wq * scales[:, None])^T + bias, as a Pallas TPU kernel.

    x      : (B, M) float32 (cast to bf16 once here for the MXU fast path)
    wq     : (N, M) int8   (quantized sparse weight, zeros preserved)
    scales : (N,)   float32 per-output-row dequantization scale
    bias   : (N,)   float32 or None
    returns: (B, N) float32

    # TODO(synk): the real qsparseprop 'sawb'/GROUPED quantizer uses per-group
    # scales along M; a per-output-row scale epilogue is only exact for
    # row-wise scales (as produced by make_quantized_sparse_params below).
    """
    B, M = x.shape
    N, M2 = wq.shape
    assert M == M2

    # --- tile selection ------------------------------------------------------
    # tm: multiple of 16 (bf16 sublane packing), cap 512 so the int8 weight
    #     streams from HBM exactly once for B <= 512.
    if tm is None:
        tm = min(_round_up(B, 16), 512)
    # tn: multiple of 128; split N into >= 2 tiles when N >= 256 so the
    #     'parallel' N axis can feed both v7x TensorCores. Cap 512.
    if tn is None:
        n128 = _cdiv(N, 128)
        if n128 >= 2:
            tn = 128 * min(4, (n128 + 1) // 2)
        else:
            tn = 128
    # tk: multiple of 128, cap 1024 (fewer, larger weight DMAs / grid steps).
    if tk is None:
        tk = min(_round_up(M, 128), 1024)

    Bp, Np, Mp = _round_up(B, tm), _round_up(N, tn), _round_up(M, tk)

    # --- pad + dtype prep (one-time XLA ops, outside the hot loop) -----------
    x_bf16 = x.astype(jnp.bfloat16)
    if (Bp, Mp) != (B, M):
        x_bf16 = jnp.pad(x_bf16, ((0, Bp - B), (0, Mp - M)))

    # Pre-transpose weight to (M, N): K major, N on lanes -> no in-kernel
    # relayout of the RHS tile. One-time int8 transpose at param-prep time.
    wqt = wq.T
    if (Mp, Np) != (M, N):
        wqt = jnp.pad(wqt, ((0, Mp - M), (0, Np - N)))

    scales2 = scales.reshape(1, N).astype(jnp.float32)
    bias_arr = (jnp.zeros((N,), jnp.float32) if bias is None
                else bias.astype(jnp.float32))
    bias2 = bias_arr.reshape(1, N)
    if Np != N:
        scales2 = jnp.pad(scales2, ((0, 0), (0, Np - N)))
        bias2 = jnp.pad(bias2, ((0, 0), (0, Np - N)))

    grid = (Bp // tm, Np // tn, Mp // tk)

    out = pl.pallas_call(
        qsl_kernel,
        out_shape=jax.ShapeDtypeStruct((Bp, Np), jnp.float32),
        grid_spec=pltpu.PrefetchScalarGridSpec(
            num_scalar_prefetch=0,
            grid=grid,
            in_specs=[
                pl.BlockSpec((tm, tk), lambda i, j, k: (i, k)),   # x tile (bf16)
                pl.BlockSpec((tk, tn), lambda i, j, k: (k, j)),   # int8 W^T tile
                pl.BlockSpec((1, tn), lambda i, j, k: (0, j)),    # per-row scales
                pl.BlockSpec((1, tn), lambda i, j, k: (0, j)),    # bias
            ],
            out_specs=pl.BlockSpec((tm, tn), lambda i, j, k: (i, j)),
        ),
        compiler_params=pltpu.CompilerParams(
            dimension_semantics=("parallel", "parallel", "arbitrary"),
            # Headroom-safe on v7x (64 MiB physical) and v5e/v6e (128 MiB);
            # actual usage with maximal tiles is ~5 MiB double-buffered.
            vmem_limit_bytes=48 * 1024 * 1024,
        ),
    )(x_bf16, wqt, scales2, bias2)

    if (Bp, Np) != (B, N):
        out = out[:B, :N]
    return out


# ----------------------------------------------------------------------------
# Glue: deterministic parameter construction mimicking the module's __init__.
# ----------------------------------------------------------------------------
def make_quantized_sparse_params(key, N, M, density=0.2):
    kw, km, kb = jax.random.split(key, 3)
    dense_w = jax.random.normal(kw, (N, M), dtype=jnp.float32) * 0.1
    # Sparsify (the "sparse" part of QuantizedSparseLinear; the CSR round-trip
    # to_csr_2d/from_csr_2d is densified here -- zeros preserved exactly).
    mask = (jax.random.uniform(km, (N, M)) < density).astype(jnp.float32)
    sparse_w = dense_w * mask

    # TODO(synk): exact 'sawb' grouped-scale coefficients from qsparseprop's
    # quantize() are not available; using per-output-row symmetric int8
    # max-abs quantization as the grouped-scale stand-in.
    absmax = jnp.max(jnp.abs(sparse_w), axis=1, keepdims=True)
    scales = jnp.where(absmax > 0, absmax / 127.0, 1.0)
    wq = jnp.clip(jnp.round(sparse_w / scales), -127, 127).astype(jnp.int8)

    bias = jax.random.normal(kb, (N,), dtype=jnp.float32) * 0.01
    return wq, scales[:, 0], bias


if __name__ == "__main__":
    # Small shapes: batch=8, in_features=256, out_features=128.
    B, M, N = 8, 256, 128

    key = jax.random.PRNGKey(0)
    kx, kp = jax.random.split(key)

    x = jax.random.normal(kx, (B, M), dtype=jnp.float32)
    wq, scales, bias = make_quantized_sparse_params(kp, N, M, density=0.2)

    y = quantized_sparse_linear(x, wq, scales, bias)
    y = jax.block_until_ready(y)
    assert y.shape == (B, N)

    # Reference 1: matches the kernel's bf16 MXU numerics (int8->bf16 exact,
    # x cast to bf16, f32 accumulation, scale/bias epilogue in f32).
    y_ref_bf16 = (
        jnp.dot(x.astype(jnp.bfloat16), wq.astype(jnp.bfloat16).T,
                preferred_element_type=jnp.float32)
        * scales[None, :] + bias[None, :]
    )
    assert jnp.allclose(y, y_ref_bf16, atol=1e-3, rtol=1e-3), (
        float(jnp.max(jnp.abs(y - y_ref_bf16))))

    # Reference 2: full-f32 dequant + matmul (looser tolerance: x is bf16 in
    # the kernel's MXU path).
    w_deq = wq.astype(jnp.float32) * scales[:, None]
    y_ref_f32 = x @ w_deq.T + bias[None, :]
    assert jnp.allclose(y, y_ref_f32, atol=5e-2, rtol=5e-2), (
        float(jnp.max(jnp.abs(y - y_ref_f32))))

    print("KERNEL_OK")
</pallas_src>

<mosaic_0001>
module attributes {stable_mosaic.version = 11 : i64} {
  func.func @qsl_kernel(%arg0: i32, %arg1: i32, %arg2: i32, %arg3: memref<16x256xbf16, #tpu.memory_space<vmem>>, %arg4: memref<256x128xi8, #tpu.memory_space<vmem>>, %arg5: memref<1x128xf32, #tpu.memory_space<vmem>>, %arg6: memref<1x128xf32, #tpu.memory_space<vmem>>, %arg7: memref<16x128xf32, #tpu.memory_space<vmem>>) attributes {dimension_semantics = [#tpu.dimension_semantics<parallel>, #tpu.dimension_semantics<parallel>, #tpu.dimension_semantics<arbitrary>], iteration_bounds = array<i64: 1, 1, 1>, scalar_prefetch = 0 : i64, scratch_operands = 0 : i64, tpu.core_type = #tpu.core_type<tc>, window_params = [{transform_indices = @transform_0, window_bounds = array<i64: 16, 256>}, {transform_indices = @transform_1, window_bounds = array<i64: 256, 128>}, {transform_indices = @transform_2, window_bounds = array<i64: 1, 128>}, {transform_indices = @transform_3, window_bounds = array<i64: 1, 128>}, {transform_indices = @transform_4, window_bounds = array<i64: 16, 128>}]} {
    %c0_i32 = arith.constant 0 : i32
    %0 = arith.cmpi eq, %arg2, %c0_i32 : i32
    %1 = arith.extui %0 : i1 to i32
    %c0_i32_0 = arith.constant 0 : i32
    %2 = arith.cmpi ne, %1, %c0_i32_0 : i32
    scf.if %2 {
      %cst_10 = arith.constant 0.000000e+00 : f32
      %13 = vector.broadcast %cst_10 : f32 to vector<16x128xf32>
      %c0_11 = arith.constant 0 : index
      %c0_12 = arith.constant 0 : index
      %14 = vector.load %arg7[%c0_11, %c0_12] : memref<16x128xf32, #tpu.memory_space<vmem>>, vector<16x128xf32>
      tpu.vector_store %arg7[%c0_11, %c0_12], %13 {strides = array<i32>} : memref<16x128xf32, #tpu.memory_space<vmem>>, vector<16x128xf32>,
    } else {
    }
    %c0 = arith.constant 0 : index
    %c0_1 = arith.constant 0 : index
    %3 = vector.load %arg7[%c0, %c0_1] : memref<16x128xf32, #tpu.memory_space<vmem>>, vector<16x128xf32>
    %c0_2 = arith.constant 0 : index
    %c0_3 = arith.constant 0 : index
    %4 = vector.load %arg3[%c0_2, %c0_3] : memref<16x256xbf16, #tpu.memory_space<vmem>>, vector<16x256xbf16>
    %c0_4 = arith.constant 0 : index
    %c0_5 = arith.constant 0 : index
    %5 = vector.load %arg4[%c0_4, %c0_5] : memref<256x128xi8, #tpu.memory_space<vmem>>, vector<256x128xi8>
    %6 = arith.sitofp %5 : vector<256x128xi8> to vector<256x128xbf16>
    %cst = arith.constant dense<0.000000e+00> : vector<16x128xf32>
    %7 = tpu.matmul %4, %6, %cst {dimension_numbers = #tpu.dot_dimension_numbers<[1], [0], [0], [1], [0, 0, 1, 1], [], []>} : vector<16x256xbf16>, vector<256x128xbf16>, vector<16x128xf32> -> vector<16x128xf32>
    %8 = arith.addf %3, %7 : vector<16x128xf32>
    %c0_6 = arith.constant 0 : index
    %c0_7 = arith.constant 0 : index
    %9 = vector.load %arg7[%c0_6, %c0_7] : memref<16x128xf32, #tpu.memory_space<vmem>>, vector<16x128xf32>
    tpu.vector_store %arg7[%c0_6, %c0_7], %8 {strides = array<i32>} : memref<16x128xf32, #tpu.memory_space<vmem>>, vector<16x128xf32>,
    %c0_i32_8 = arith.constant 0 : i32
    %10 = arith.cmpi eq, %arg2, %c0_i32_8 : i32
    %11 = arith.extui %10 : i1 to i32
    %c0_i32_9 = arith.constant 0 : i32
    %12 = arith.cmpi ne, %11, %c0_i32_9 : i32
    scf.if %12 {
      %c0_10 = arith.constant 0 : index
      %c0_11 = arith.constant 0 : index
      %13 = vector.load %arg7[%c0_10, %c0_11] : memref<16x128xf32, #tpu.memory_space<vmem>>, vector<16x128xf32>
      %c0_12 = arith.constant 0 : index
      %c0_13 = arith.constant 0 : index
      %14 = vector.load %arg5[%c0_12, %c0_13] : memref<1x128xf32, #tpu.memory_space<vmem>>, vector<1x128xf32>
      %15 = vector.broadcast %14 : vector<1x128xf32> to vector<16x128xf32>
      %16 = arith.mulf %13, %15 : vector<16x128xf32>
      %c0_14 = arith.constant 0 : index
      %c0_15 = arith.constant 0 : index
      %17 = vector.load %arg6[%c0_14, %c0_15] : memref<1x128xf32, #tpu.memory_space<vmem>>, vector<1x128xf32>
      %18 = vector.broadcast %17 : vector<1x128xf32> to vector<16x128xf32>
      %19 = arith.addf %16, %18 : vector<16x128xf32>
      %c0_16 = arith.constant 0 : index
      %c0_17 = arith.constant 0 : index
      %20 = vector.load %arg7[%c0_16, %c0_17] : memref<16x128xf32, #tpu.memory_space<vmem>>, vector<16x128xf32>
      tpu.vector_store %arg7[%c0_16, %c0_17], %19 {strides = array<i32>} : memref<16x128xf32, #tpu.memory_space<vmem>>, vector<16x128xf32>,
    } else {
    }
    return
  }
  func.func @transform_0(%arg0: i32, %arg1: i32, %arg2: i32) -> (i32, i32) {
    %c0_i32 = arith.constant 0 : i32
    return %arg0, %arg2 : i32, i32
  }
  func.func @transform_1(%arg0: i32, %arg1: i32, %arg2: i32) -> (i32, i32) {
    %c0_i32 = arith.constant 0 : i32
    return %arg2, %arg1 : i32, i32
  }
  func.func @transform_2(%arg0: i32, %arg1: i32, %arg2: i32) -> (i32, i32) {
    %c0_i32 = arith.constant 0 : i32
    %c0_i32_0 = arith.constant 0 : i32
    return %c0_i32, %arg1 : i32, i32
  }
  func.func @transform_3(%arg0: i32, %arg1: i32, %arg2: i32) -> (i32, i32) {
    %c0_i32 = arith.constant 0 : i32
    %c0_i32_0 = arith.constant 0 : i32
    return %c0_i32, %arg1 : i32, i32
  }
  func.func @transform_4(%arg0: i32, %arg1: i32, %arg2: i32) -> (i32, i32) {
    %c0_i32 = arith.constant 0 : i32
    return %arg0, %arg1 : i32, i32
  }
}

</mosaic_0001>

<llo_original>
// kernel: tpu_custom_call.1
$region0: #{tpu_custom_call.1}
  #allocation0 [shape = 'u32[]', space=smem, size = 0x4, offset = 0x4, fixed_abs, tag = 'smem constant byte address 0x4 - core index']
  #allocation1 [shape = 'u32[144,128]{1,0:T(1,128)}', space=vmem, size = 0x12000, scoped, tag = 'internal scratch']
  %s0 = inlined_call_operand.hbm [shape: bf16[16,256], index: 0, kind: input, shape index: {}]
  %s1 = inlined_call_operand.hbm [shape: s8[256,128], index: 1, kind: input, shape index: {}]
  %s2 = inlined_call_operand.vmem [shape: f32[1,128], index: 2, kind: input, shape index: {}]
  %s3 = inlined_call_operand.vmem [shape: f32[1,128], index: 3, kind: input, shape index: {}]
  %s4 = inlined_call_operand.hbm [shape: f32[16,128], index: 4, kind: output, shape index: {}]
  %s5 = sld [smem:[#allocation0]]
  $region42: #{tpu_custom_call.1} parent=0
    _
  %s7 = ssub.s32 1, %s5
  %s8 = scalar_select 0, %s7, %s5
  $region1: #{tpu_custom_call.1} parent=0
    #allocation2 [shape = 'u8[8192]{0}', space=vmem, size = 0x2000, scoped, tag = 'input window, operand 0, single buffered']
    #allocation3 [shape = 's32[1]{0}', space=sflag, size = 0x4, scoped, tag = 'scoped memory for tpu_custom_call.1']
    #allocation4 [shape = 's32[1]{0}', space=sflag, size = 0x4, scoped, tag = 'scoped memory for tpu_custom_call.1']
    #allocation5 [shape = 'u8[32768]{0}', space=vmem, size = 0x8000, scoped, tag = 'input window, operand 1, single buffered']
    #allocation6 [shape = 's32[1]{0}', space=sflag, size = 0x4, scoped, tag = 'scoped memory for tpu_custom_call.1']
    #allocation7 [shape = 'u8[8192]{0}', space=vmem, size = 0x2000, scoped, tag = 'output window, operand 0, single buffered']
    %9 = vsyncpa [#allocation3], 0
    %10 = vsyncpa [#allocation6], 0
    %11 = vsyncpa [#allocation4], 0
    // Predicated region
    $region2: #{tpu_custom_call.1} parent=1 // pred_check
      _
    $region3: #{tpu_custom_call.1} parent=1 // pred_check_branch
      %13 = sbr.rel (0) target = $region5
    $region4: #{tpu_custom_call.1} parent=1 // pred_region
      %s15 = ssub.s32 256, 256
      %16 = vsyncadd [#allocation3], %s15
      %s17 = sshll.u32 [#allocation2], 4
      %s18 = int_to_ptr.vmem [resolvable:$true] %s17
      %23 = dma.hbm_to_vmem [thread:$0]  %s0, 256, %s18, [#allocation3], 128, 128, 8
    $region5: #{tpu_custom_call.1} parent=1 // pred_fallthru
      _
    // Predicated region
    $region6: #{tpu_custom_call.1} parent=1 // pred_check
      _
    $region7: #{tpu_custom_call.1} parent=1 // pred_check_branch
      %25 = sbr.rel (0) target = $region9
    $region8: #{tpu_custom_call.1} parent=1 // pred_region
      %s27 = ssub.s32 1024, 1024
      %28 = vsyncadd [#allocation6], %s27
      %s29 = sshll.u32 [#allocation5], 4
      %s30 = int_to_ptr.vmem [resolvable:$true] %s29
      %35 = dma.hbm_to_vmem [thread:$0]  %s1, 1024, %s30, [#allocation6], 128, 128, 8
    $region9: #{tpu_custom_call.1} parent=1 // pred_fallthru
      _
    // Predicated region
    $region10: #{tpu_custom_call.1} parent=1 // pred_check
      _
    $region11: #{tpu_custom_call.1} parent=1 // pred_check_branch
      %37 = sbr.rel (0) target = $region13
    $region12: #{tpu_custom_call.1} parent=1 // pred_region
      _
    $region13: #{tpu_custom_call.1} parent=1 // pred_fallthru
      _
    // Predicated region
    $region14: #{tpu_custom_call.1} parent=1 // pred_check
      _
    $region15: #{tpu_custom_call.1} parent=1 // pred_check_branch
      %39 = sbr.rel (0) target = $region17
    $region16: #{tpu_custom_call.1} parent=1 // pred_region
      _
    $region17: #{tpu_custom_call.1} parent=1 // pred_fallthru
      _
    // Predicated region
    $region18: #{tpu_custom_call.1} parent=1 // pred_check
      _
    $region19: #{tpu_custom_call.1} parent=1 // pred_check_branch
      %41 = sbr.rel (0) target = $region21
    $region20: #{tpu_custom_call.1} parent=1 // pred_region
      %42 = dma.done [#allocation3], 256
    $region21: #{tpu_custom_call.1} parent=1 // pred_fallthru
      _
    // Predicated region
    $region22: #{tpu_custom_call.1} parent=1 // pred_check
      _
    $region23: #{tpu_custom_call.1} parent=1 // pred_check_branch
      %44 = sbr.rel (0) target = $region25
    $region24: #{tpu_custom_call.1} parent=1 // pred_region
      %45 = dma.done [#allocation6], 1024
    $region25: #{tpu_custom_call.1} parent=1 // pred_fallthru
      _
    %p47 = scmp.eq.s32.totalorder 0, 0
    // Predicated region
    $region26: #{tpu_custom_call.1} parent=1 // pred_check
      %p48 = pneg %p47
    $region27: #{tpu_custom_call.1} parent=1 // pred_check_branch
      %50 = sbr.rel (%p48) target = $region29
    $region28: #{tpu_custom_call.1} parent=1 // pred_region
      %51 = vst [vmem:[#allocation7] sm:$0xff] 0.0
      %52 = vst [vmem:[#allocation7 + $0x8] sm:$0xff] 0.0
    $region29: #{tpu_custom_call.1} parent=1 // pred_fallthru
      _
    %v53 = vld [vmem:[#allocation7] sm:$0xff]
    %v54 = vld [vmem:[#allocation7 + $0x8] sm:$0xff]
    %v55 = vld [vmem:[#allocation2] sm:$0xff]
    %v56 = vld [vmem:[#allocation2 + $0x8] sm:$0xff]
    %v57 = vld [vmem:[#allocation5] sm:$0xff]
    %v58 = vld [vmem:[#allocation5 + $0x8] sm:$0xff]
    %v59 = vld [vmem:[#allocation5 + $0x10] sm:$0xff]
    %v60 = vld [vmem:[#allocation5 + $0x18] sm:$0xff]
    %v61 = vld [vmem:[#allocation5 + $0x20] sm:$0xff]
    %v62 = vld [vmem:[#allocation5 + $0x28] sm:$0xff]
    %v63 = vld [vmem:[#allocation5 + $0x30] sm:$0xff]
    %v64 = vld [vmem:[#allocation5 + $0x38] sm:$0xff]
    %v65 = vunpack.c.l.s8.bf16 %v57
    %v66 = vunpack.c.h.s8.bf16 %v57
    %v67 = vunpack.c.l.s8.bf16 %v58
    %v68 = vunpack.c.h.s8.bf16 %v58
    %v69 = vunpack.c.l.s8.bf16 %v59
    %v70 = vunpack.c.h.s8.bf16 %v59
    %v71 = vunpack.c.l.s8.bf16 %v60
    %v72 = vunpack.c.h.s8.bf16 %v60
    %v73 = vunpack.c.l.s8.bf16 %v61
    %v74 = vunpack.c.h.s8.bf16 %v61
    %v75 = vunpack.c.l.s8.bf16 %v62
    %v76 = vunpack.c.h.s8.bf16 %v62
    %v77 = vunpack.c.l.s8.bf16 %v63
    %v78 = vunpack.c.h.s8.bf16 %v63
    %v79 = vunpack.c.l.s8.bf16 %v64
    %v80 = vunpack.c.h.s8.bf16 %v64
    %v83 = vunpack.c.l.b16 %v55
    %v84 = vunpack.c.h.b16 %v55
    %v85 = vunpack.c.l.b16 %v56
    %v86 = vunpack.c.h.b16 %v56
    %v87 = vpack.c.b16 %v85, %v83
    %v88 = vpack.c.b16 %v86, %v84
    %91 = vmatprep.subr.bf16.mxu0 0
    %92 = vmatpush1.bf16.msra.mxu0 %v65
    %93 = vmatprep.subr.bf16.mxu0 0
    %94 = vmatpush1.bf16.msra.mxu0 %v66
    %95 = vmatprep.subr.bf16.mxu0 0
    %96 = vmatpush1.bf16.msra.mxu0 %v67
    %97 = vmatprep.subr.bf16.mxu0 0
    %98 = vmatpush1.bf16.msra.mxu0 %v68
    %99 = vmatprep.subr.bf16.mxu0 0
    %100 = vmatpush1.bf16.msra.mxu0 %v69
    %101 = vmatprep.subr.bf16.mxu0 0
    %102 = vmatpush1.bf16.msra.mxu0 %v70
    %103 = vmatprep.subr.bf16.mxu0 0
    %104 = vmatpush1.bf16.msra.mxu0 %v71
    %105 = vmatprep.subr.bf16.mxu0 0
    %106 = vmatpush1.bf16.msra.mxu0 %v72
    %107 = vmatprep.subr.bf16.mxu0 0
    %108 = vmatpush1.bf16.msra.mxu0 %v73
    %109 = vmatprep.subr.bf16.mxu0 0
    %110 = vmatpush1.bf16.msra.mxu0 %v74
    %111 = vmatprep.subr.bf16.mxu0 0
    %112 = vmatpush1.bf16.msra.mxu0 %v75
    %113 = vmatprep.subr.bf16.mxu0 0
    %114 = vmatpush1.bf16.msra.mxu0 %v76
    %115 = vmatprep.subr.bf16.mxu0 0
    %116 = vmatpush1.bf16.msra.mxu0 %v77
    %117 = vmatprep.subr.bf16.mxu0 0
    %118 = vmatpush1.bf16.msra.mxu0 %v78
    %119 = vmatprep.subr.bf16.mxu0 0
    %120 = vmatpush1.bf16.msra.mxu0 %v79
    %121 = vmatprep.subr.bf16.mxu0 0
    %122 = vmatpush1.bf16.msra.mxu0 %v80
    %123 = vmatprep.mubr.bf16.mxu0 %v88
    %124 = vmatmul.mubr.bf16.gmra.mrb[0].mxu0 %v87
    %v125 = vpop.f32.mrb[0].mxu0
    %v126 = vadd.f32 0.0, %v125
    %v127 = vpop.f32.mrb[0].mxu0
    %v128 = vpop.f32.mrb[0].mxu0
    %v129 = vadd.f32 0.0, %v128
    %v130 = vpop.f32.mrb[0].mxu0
    %131 = vdwg.mxu0
    %v132 = vadd.f32 %v53, %v126
    %v133 = vadd.f32 %v54, %v129
    %134 = vst [vmem:[#allocation7] sm:$0xff] %v132
    %135 = vst [vmem:[#allocation7 + $0x8] sm:$0xff] %v133
    // Predicated region
    $region30: #{tpu_custom_call.1} parent=1 // pred_check
      %p136 = pneg %p47
    $region31: #{tpu_custom_call.1} parent=1 // pred_check_branch
      %138 = sbr.rel (%p136) target = $region33
    $region32: #{tpu_custom_call.1} parent=1 // pred_region
      %v139 = vld [vmem:[#allocation7] sm:$0xff]
      %v140 = vld [vmem:[#allocation7 + $0x8] sm:$0xff]
      %v141 = vld [vmem:[%s2] sm:$0x1]
      %v143 = vlaneseq
      %v144 = vshrl.u32 %v143, 7
      %v145 = vsub.s32 0, %v144
      %v146 = vrot.slane %v141, %v145
      %v148 = vmul.f32 %v139, %v146
      %v149 = vmul.f32 %v140, %v146
      %v150 = vld [vmem:[%s3] sm:$0x1]
      %v152 = vlaneseq
      %v153 = vshrl.u32 %v152, 7
      %v154 = vsub.s32 0, %v153
      %v155 = vrot.slane %v150, %v154
      %v157 = vadd.f32 %v148, %v155
      %v158 = vadd.f32 %v149, %v155
      %159 = vst [vmem:[#allocation7] sm:$0xff] %v157
      %160 = vst [vmem:[#allocation7 + $0x8] sm:$0xff] %v158
    $region33: #{tpu_custom_call.1} parent=1 // pred_fallthru
      _
    // Predicated region
    $region34: #{tpu_custom_call.1} parent=1 // pred_check
      _
    $region35: #{tpu_custom_call.1} parent=1 // pred_check_branch
      %162 = sbr.rel (0) target = $region37
    $region36: #{tpu_custom_call.1} parent=1 // pred_region
      %s164 = ssub.s32 256, 256
      %165 = vsyncadd [#allocation4], %s164
      %s166 = sshll.u32 [#allocation7], 4
      %s167 = int_to_ptr.vmem [resolvable:$true] %s166
      %172 = dma.vmem_to_hbm [thread:$0]  %s167, 256, %s4, [#allocation4], 128, 128, 8
    $region37: #{tpu_custom_call.1} parent=1 // pred_fallthru
      _
    // Predicated region
    $region38: #{tpu_custom_call.1} parent=1 // pred_check
      _
    $region39: #{tpu_custom_call.1} parent=1 // pred_check_branch
      %174 = sbr.rel (0) target = $region41
    $region40: #{tpu_custom_call.1} parent=1 // pred_region
      %175 = dma.done [#allocation4], 256
    $region41: #{tpu_custom_call.1} parent=1 // pred_fallthru
      _
    %176 = vsyncpa [#allocation3], 1
    %177 = vsyncpa [#allocation6], 1
    %178 = vsyncpa [#allocation4], 1

</llo_original>
